<compile_context>
chip_gen: v7x
topology: tpu7x:2x2x1
jax: 0.10.0
libtpu: 0.0.40
codegen_flags: <defaults>
</compile_context>

<pallas_src>
import math
import functools

import jax
import jax.numpy as jnp
from jax.experimental import pallas as pl
from jax.experimental.pallas import tpu as pltpu

LANE = 128      # lane width (last-dim tiling unit)
SUBLANE = 8     # sublane width (second-to-last-dim tiling unit)


def _round_up(x, m):
    return ((x + m - 1) // m) * m


# -----------------------------------------------------------------------------
# Pallas kernel: fused stack of Linear(+ReLU) layers, all resident in VMEM.
# -----------------------------------------------------------------------------
def _fused_stack_kernel(x_ref, *refs, relu_flags, out_dim):
    # refs = (w0, b0, w1, b1, ..., w_{L-1}, b_{L-1}, o_ref)
    o_ref = refs[-1]
    wb_refs = refs[:-1]

    h = x_ref[...].astype(jnp.float32)                 # (Bt, d_in)
    for li, apply_relu in enumerate(relu_flags):
        w = wb_refs[2 * li][...]                       # (K_i, Np_i), bf16 (or f32 debug)
        b = wb_refs[2 * li + 1][...]                   # (1, Np_i),  f32
        acc = jnp.dot(h.astype(w.dtype), w,
                      preferred_element_type=jnp.float32)
        acc = acc + b                                  # broadcast over batch, f32
        if apply_relu:
            acc = jnp.maximum(acc, 0.0)
        h = acc
    o_ref[...] = h[:, :out_dim].astype(o_ref.dtype)


def fused_stack_pallas(x, ws, bs, relu_flags, out_dim, *, batch_tile=256):
    """Run a full Linear(+ReLU) stack in one pallas_call.

    x:  (B, d_in) unpadded activations.
    ws: per-layer weights, layer 0 is (d_in, Np0), layer i>0 is (Np_{i-1}, Np_i)
        with Np = round_up(fan_out, 128); padded entries are zero.
    bs: per-layer biases (1, Np_i), f32.
    """
    B, d_in = x.shape
    L = len(ws)
    assert d_in == ws[0].shape[0], (d_in, ws[0].shape)

    wb = []
    for w, b in zip(ws, bs):
        wb.extend((w, b))

    kernel = functools.partial(
        _fused_stack_kernel,
        relu_flags=tuple(bool(r) for r in relu_flags),
        out_dim=int(out_dim),
    )

    param_bytes = sum(int(a.size) * a.dtype.itemsize for a in wb)
    flops = 2 * int(B) * sum(int(w.shape[0]) * int(w.shape[1]) for w in ws)
    io_bytes = (int(x.size) + int(B) * int(out_dim)) * x.dtype.itemsize
    cost = pl.CostEstimate(flops=flops, transcendentals=0,
                           bytes_accessed=param_bytes + io_bytes)
    max_np = max(int(w.shape[1]) for w in ws)

    if B <= batch_tile:
        # Gridless: every array whole in VMEM, no batch padding needed
        # (full-extent refs are exempt from the (8,128) divisibility rule).
        act_bytes = 4 * _round_up(B, SUBLANE) * max_np * 4
        vmem_limit = int(min(96 << 20,
                             max(32 << 20, 2 * param_bytes + act_bytes + (4 << 20))))
        return pl.pallas_call(
            kernel,
            out_shape=jax.ShapeDtypeStruct((B, out_dim), x.dtype),
            in_specs=[pl.BlockSpec(memory_space=pltpu.MemorySpace.VMEM)] * (1 + 2 * L),
            out_specs=pl.BlockSpec(memory_space=pltpu.MemorySpace.VMEM),
            compiler_params=pltpu.CompilerParams(vmem_limit_bytes=vmem_limit),
            cost_estimate=cost,
        )(x, *wb)

    # Batch-tiled path: grid over batch; weights/biases stay resident
    # (constant index_map); batch axis marked "parallel" (2 TCs on v7x).
    TB = batch_tile
    Bp = _round_up(B, TB)
    x_in = x if Bp == B else jnp.zeros((Bp, d_in), x.dtype).at[:B].set(x)
    act_bytes = 4 * TB * max_np * 4
    io_block_bytes = 2 * TB * (d_in + int(out_dim)) * x.dtype.itemsize
    vmem_limit = int(min(96 << 20,
                         max(32 << 20,
                             2 * param_bytes + act_bytes + io_block_bytes + (4 << 20))))
    wb_specs = [pl.BlockSpec(a.shape, lambda i: (0, 0)) for a in wb]
    y = pl.pallas_call(
        kernel,
        out_shape=jax.ShapeDtypeStruct((Bp, out_dim), x.dtype),
        grid=(Bp // TB,),
        in_specs=[pl.BlockSpec((TB, d_in), lambda i: (i, 0))] + wb_specs,
        out_specs=pl.BlockSpec((TB, out_dim), lambda i: (i, 0)),
        compiler_params=pltpu.CompilerParams(
            dimension_semantics=("parallel",),
            vmem_limit_bytes=vmem_limit),
        cost_estimate=cost,
    )(x_in, *wb)
    return y if Bp == B else y[:B]


# -----------------------------------------------------------------------------
# AUTOCODER parameter construction (mirrors the PyTorch __init__ arithmetic).
# -----------------------------------------------------------------------------
def autocoder_layer_dims(vect_length, num_layer, code_length):
    ds = (vect_length / code_length) ** (1.0 / num_layer)
    enc_dims = []
    for i in range(num_layer - 1):
        enc_dims.append((int(vect_length // ds**i), int(vect_length // ds ** (i + 1))))
    enc_dims.append((int(vect_length // ds ** (num_layer - 1)), code_length))

    dec_dims = []
    for i in range(num_layer - 1):
        dec_dims.append((int(code_length * ds**i), int(code_length * ds ** (i + 1))))
    dec_dims.append((int(code_length * ds ** (num_layer - 1)), vect_length))
    return enc_dims, dec_dims


def init_linear(key, fan_in, fan_out, dtype=jnp.float32):
    # nn.Linear default init: U(-1/sqrt(fan_in), 1/sqrt(fan_in)).
    kw, kb = jax.random.split(key)
    bound = 1.0 / math.sqrt(fan_in)
    # Stored as (fan_in, fan_out), i.e. already transposed vs. PyTorch.
    w = jax.random.uniform(kw, (fan_in, fan_out), dtype, -bound, bound)
    b = jax.random.uniform(kb, (fan_out,), dtype, -bound, bound)
    return w, b


def make_params(key, vect_length, num_layer, code_length):
    enc_dims, dec_dims = autocoder_layer_dims(vect_length, num_layer, code_length)
    assert all(fi > 0 and fo > 0 for fi, fo in enc_dims + dec_dims), "degenerate layer dims"
    params = {"encoder": [], "decoder": []}
    idx = 0
    for (fi, fo) in enc_dims:
        params["encoder"].append(init_linear(jax.random.fold_in(key, idx), fi, fo))
        idx += 1
    for (fi, fo) in dec_dims:
        params["decoder"].append(init_linear(jax.random.fold_in(key, idx), fi, fo))
        idx += 1
    return params


# -----------------------------------------------------------------------------
# One-time packing: per-layer padded shapes (no global square), bf16 weights.
# -----------------------------------------------------------------------------
def _pack_chain(layers, relu_flags, param_dtype, bias_dtype):
    ws, bs = [], []
    for idx, (w, b) in enumerate(layers):
        fi, fo = int(w.shape[0]), int(w.shape[1])
        kp = fi if idx == 0 else _round_up(fi, LANE)   # layer 0 K matches raw input
        np_ = _round_up(fo, LANE)
        wp = jnp.zeros((kp, np_), param_dtype).at[:fi, :fo].set(w.astype(param_dtype))
        bp = jnp.zeros((1, np_), bias_dtype).at[0, :fo].set(b.astype(bias_dtype))
        ws.append(wp)
        bs.append(bp)
    return {
        "ws": tuple(ws), "bs": tuple(bs),
        "relu": tuple(bool(r) for r in relu_flags),
        "in_dim": int(layers[0][0].shape[0]),
        "out_dim": int(layers[-1][0].shape[1]),
    }


def pack_params(params, param_dtype=jnp.bfloat16, bias_dtype=jnp.float32):
    enc, dec = params["encoder"], params["decoder"]
    enc_relu = [True] * (len(enc) - 1) + [False]
    dec_relu = [True] * (len(dec) - 1) + [False]
    return {
        "enc": _pack_chain(enc, enc_relu, param_dtype, bias_dtype),
        "dec": _pack_chain(dec, dec_relu, param_dtype, bias_dtype),
        "full": _pack_chain(enc + dec, enc_relu + dec_relu, param_dtype, bias_dtype),
    }


# -----------------------------------------------------------------------------
# Forward pass, matching AUTOCODER.forward semantics.
# -----------------------------------------------------------------------------
def autocoder_forward(packed, x, coder=2, training=True, batch_tile=256):
    if training and coder == 2:
        chain = packed["full"]     # decoder(encoder(x)) in ONE fused kernel
    elif coder == 0:
        chain = packed["enc"]
    elif coder == 1:
        chain = packed["dec"]
    else:
        # TODO(synk): PyTorch returns None for (eval mode, coder==2); preserved.
        return None
    assert x.shape[-1] == chain["in_dim"], (x.shape, chain["in_dim"])
    return fused_stack_pallas(x, chain["ws"], chain["bs"], chain["relu"],
                              chain["out_dim"], batch_tile=batch_tile)


# -----------------------------------------------------------------------------
# Reference (plain JAX) forward on the unpadded params.
# -----------------------------------------------------------------------------
def reference_stack(layers, h):
    n = len(layers)
    for li, (w, b) in enumerate(layers):
        h = h @ w + b
        if li < n - 1:
            h = jnp.maximum(h, 0.0)
    return h


def reference_forward(params, x):
    return reference_stack(params["decoder"], reference_stack(params["encoder"], x))


if __name__ == "__main__":
    # Small configuration: vect_length=64, num_layer=3, code_length=8
    #   encoder: 64 -> 32 -> 16 -> 8, decoder: 8 -> 16 -> 32 -> 64
    VECT_LENGTH, NUM_LAYER, CODE_LENGTH = 64, 3, 8
    BATCH = 8

    key = jax.random.PRNGKey(0)
    pkey, xkey, zkey = jax.random.split(key, 3)
    params = make_params(pkey, VECT_LENGTH, NUM_LAYER, CODE_LENGTH)

    packed_bf16 = pack_params(params)                               # fast path (default)
    packed_f32 = pack_params(params, param_dtype=jnp.float32)       # exact/debug path

    x = jax.random.normal(xkey, (BATCH, VECT_LENGTH), jnp.float32)
    ref_full = jax.block_until_ready(reference_forward(params, x))
    ref_code = jax.block_until_ready(reference_stack(params["encoder"], x))

    # Full autoencoder (training, coder=2): single fused 6-layer kernel.
    out32 = jax.block_until_ready(autocoder_forward(packed_f32, x, coder=2, training=True))
    assert out32.shape == (BATCH, VECT_LENGTH), out32.shape
    assert jnp.allclose(out32, ref_full, atol=1e-5, rtol=1e-5), "f32 mismatch (coder=2)"

    out16 = jax.block_until_ready(autocoder_forward(packed_bf16, x, coder=2, training=True))
    assert out16.shape == (BATCH, VECT_LENGTH), out16.shape
    assert jnp.allclose(out16, ref_full, atol=5e-2, rtol=5e-2), "bf16 mismatch (coder=2)"

    # Encoder-only (coder=0).
    code = jax.block_until_ready(autocoder_forward(packed_f32, x, coder=0, training=False))
    assert code.shape == (BATCH, CODE_LENGTH), code.shape
    assert jnp.allclose(code, ref_code, atol=1e-5, rtol=1e-5), "mismatch (coder=0)"

    # Decoder-only (coder=1).
    z = jax.random.normal(zkey, (BATCH, CODE_LENGTH), jnp.float32)
    dec = jax.block_until_ready(autocoder_forward(packed_f32, z, coder=1, training=False))
    assert dec.shape == (BATCH, VECT_LENGTH), dec.shape
    assert jnp.allclose(dec, reference_stack(params["decoder"], z),
                        atol=1e-5, rtol=1e-5), "mismatch (coder=1)"

    # Large batch (300 > 256): exercises the batch-tiled grid path
    # ("parallel" batch axis for v7x's two TensorCores).
    xb = jax.random.normal(jax.random.fold_in(key, 7), (300, VECT_LENGTH), jnp.float32)
    outb = jax.block_until_ready(autocoder_forward(packed_bf16, xb, coder=2, training=True))
    assert outb.shape == (300, VECT_LENGTH), outb.shape
    ref_b = jax.block_until_ready(reference_forward(params, xb))
    assert jnp.allclose(outb, ref_b, atol=5e-2, rtol=5e-2), "bf16 mismatch (batched grid)"

    print("KERNEL_OK")
</pallas_src>

<mosaic_0001>
module attributes {stable_mosaic.version = 11 : i64} {
  func.func @_fused_stack_kernel(%arg0: memref<8x64xf32, #tpu.memory_space<vmem>>, %arg1: memref<64x128xf32, #tpu.memory_space<vmem>>, %arg2: memref<1x128xf32, #tpu.memory_space<vmem>>, %arg3: memref<128x128xf32, #tpu.memory_space<vmem>>, %arg4: memref<1x128xf32, #tpu.memory_space<vmem>>, %arg5: memref<128x128xf32, #tpu.memory_space<vmem>>, %arg6: memref<1x128xf32, #tpu.memory_space<vmem>>, %arg7: memref<128x128xf32, #tpu.memory_space<vmem>>, %arg8: memref<1x128xf32, #tpu.memory_space<vmem>>, %arg9: memref<128x128xf32, #tpu.memory_space<vmem>>, %arg10: memref<1x128xf32, #tpu.memory_space<vmem>>, %arg11: memref<128x128xf32, #tpu.memory_space<vmem>>, %arg12: memref<1x128xf32, #tpu.memory_space<vmem>>, %arg13: memref<8x64xf32, #tpu.memory_space<vmem>>) attributes {dimension_semantics = [], scalar_prefetch = 0 : i64, scratch_operands = 0 : i64, tpu.core_type = #tpu.core_type<tc>} {
    %c0 = arith.constant 0 : index
    %c0_0 = arith.constant 0 : index
    %0 = vector.load %arg0[%c0, %c0_0] : memref<8x64xf32, #tpu.memory_space<vmem>>, vector<8x64xf32>
    %c0_1 = arith.constant 0 : index
    %c0_2 = arith.constant 0 : index
    %1 = vector.load %arg1[%c0_1, %c0_2] : memref<64x128xf32, #tpu.memory_space<vmem>>, vector<64x128xf32>
    %c0_3 = arith.constant 0 : index
    %c0_4 = arith.constant 0 : index
    %2 = vector.load %arg2[%c0_3, %c0_4] : memref<1x128xf32, #tpu.memory_space<vmem>>, vector<1x128xf32>
    %cst = arith.constant dense<0.000000e+00> : vector<8x128xf32>
    %3 = tpu.matmul %0, %1, %cst {dimension_numbers = #tpu.dot_dimension_numbers<[1], [0], [0], [1], [0, 0, 1, 1], [], []>} : vector<8x64xf32>, vector<64x128xf32>, vector<8x128xf32> -> vector<8x128xf32>
    %4 = vector.broadcast %2 : vector<1x128xf32> to vector<8x128xf32>
    %5 = arith.addf %3, %4 : vector<8x128xf32>
    %cst_5 = arith.constant 0.000000e+00 : f32
    %6 = vector.broadcast %cst_5 : f32 to vector<8x128xf32>
    %7 = arith.maximumf %5, %6 : vector<8x128xf32>
    %c0_6 = arith.constant 0 : index
    %c0_7 = arith.constant 0 : index
    %8 = vector.load %arg3[%c0_6, %c0_7] : memref<128x128xf32, #tpu.memory_space<vmem>>, vector<128x128xf32>
    %c0_8 = arith.constant 0 : index
    %c0_9 = arith.constant 0 : index
    %9 = vector.load %arg4[%c0_8, %c0_9] : memref<1x128xf32, #tpu.memory_space<vmem>>, vector<1x128xf32>
    %cst_10 = arith.constant dense<0.000000e+00> : vector<8x128xf32>
    %10 = tpu.matmul %7, %8, %cst_10 {dimension_numbers = #tpu.dot_dimension_numbers<[1], [0], [0], [1], [0, 0, 1, 1], [], []>} : vector<8x128xf32>, vector<128x128xf32>, vector<8x128xf32> -> vector<8x128xf32>
    %11 = vector.broadcast %9 : vector<1x128xf32> to vector<8x128xf32>
    %12 = arith.addf %10, %11 : vector<8x128xf32>
    %cst_11 = arith.constant 0.000000e+00 : f32
    %13 = vector.broadcast %cst_11 : f32 to vector<8x128xf32>
    %14 = arith.maximumf %12, %13 : vector<8x128xf32>
    %c0_12 = arith.constant 0 : index
    %c0_13 = arith.constant 0 : index
    %15 = vector.load %arg5[%c0_12, %c0_13] : memref<128x128xf32, #tpu.memory_space<vmem>>, vector<128x128xf32>
    %c0_14 = arith.constant 0 : index
    %c0_15 = arith.constant 0 : index
    %16 = vector.load %arg6[%c0_14, %c0_15] : memref<1x128xf32, #tpu.memory_space<vmem>>, vector<1x128xf32>
    %cst_16 = arith.constant dense<0.000000e+00> : vector<8x128xf32>
    %17 = tpu.matmul %14, %15, %cst_16 {dimension_numbers = #tpu.dot_dimension_numbers<[1], [0], [0], [1], [0, 0, 1, 1], [], []>} : vector<8x128xf32>, vector<128x128xf32>, vector<8x128xf32> -> vector<8x128xf32>
    %18 = vector.broadcast %16 : vector<1x128xf32> to vector<8x128xf32>
    %19 = arith.addf %17, %18 : vector<8x128xf32>
    %c0_17 = arith.constant 0 : index
    %c0_18 = arith.constant 0 : index
    %20 = vector.load %arg7[%c0_17, %c0_18] : memref<128x128xf32, #tpu.memory_space<vmem>>, vector<128x128xf32>
    %c0_19 = arith.constant 0 : index
    %c0_20 = arith.constant 0 : index
    %21 = vector.load %arg8[%c0_19, %c0_20] : memref<1x128xf32, #tpu.memory_space<vmem>>, vector<1x128xf32>
    %cst_21 = arith.constant dense<0.000000e+00> : vector<8x128xf32>
    %22 = tpu.matmul %19, %20, %cst_21 {dimension_numbers = #tpu.dot_dimension_numbers<[1], [0], [0], [1], [0, 0, 1, 1], [], []>} : vector<8x128xf32>, vector<128x128xf32>, vector<8x128xf32> -> vector<8x128xf32>
    %23 = vector.broadcast %21 : vector<1x128xf32> to vector<8x128xf32>
    %24 = arith.addf %22, %23 : vector<8x128xf32>
    %cst_22 = arith.constant 0.000000e+00 : f32
    %25 = vector.broadcast %cst_22 : f32 to vector<8x128xf32>
    %26 = arith.maximumf %24, %25 : vector<8x128xf32>
    %c0_23 = arith.constant 0 : index
    %c0_24 = arith.constant 0 : index
    %27 = vector.load %arg9[%c0_23, %c0_24] : memref<128x128xf32, #tpu.memory_space<vmem>>, vector<128x128xf32>
    %c0_25 = arith.constant 0 : index
    %c0_26 = arith.constant 0 : index
    %28 = vector.load %arg10[%c0_25, %c0_26] : memref<1x128xf32, #tpu.memory_space<vmem>>, vector<1x128xf32>
    %cst_27 = arith.constant dense<0.000000e+00> : vector<8x128xf32>
    %29 = tpu.matmul %26, %27, %cst_27 {dimension_numbers = #tpu.dot_dimension_numbers<[1], [0], [0], [1], [0, 0, 1, 1], [], []>} : vector<8x128xf32>, vector<128x128xf32>, vector<8x128xf32> -> vector<8x128xf32>
    %30 = vector.broadcast %28 : vector<1x128xf32> to vector<8x128xf32>
    %31 = arith.addf %29, %30 : vector<8x128xf32>
    %cst_28 = arith.constant 0.000000e+00 : f32
    %32 = vector.broadcast %cst_28 : f32 to vector<8x128xf32>
    %33 = arith.maximumf %31, %32 : vector<8x128xf32>
    %c0_29 = arith.constant 0 : index
    %c0_30 = arith.constant 0 : index
    %34 = vector.load %arg11[%c0_29, %c0_30] : memref<128x128xf32, #tpu.memory_space<vmem>>, vector<128x128xf32>
    %c0_31 = arith.constant 0 : index
    %c0_32 = arith.constant 0 : index
    %35 = vector.load %arg12[%c0_31, %c0_32] : memref<1x128xf32, #tpu.memory_space<vmem>>, vector<1x128xf32>
    %cst_33 = arith.constant dense<0.000000e+00> : vector<8x128xf32>
    %36 = tpu.matmul %33, %34, %cst_33 {dimension_numbers = #tpu.dot_dimension_numbers<[1], [0], [0], [1], [0, 0, 1, 1], [], []>} : vector<8x128xf32>, vector<128x128xf32>, vector<8x128xf32> -> vector<8x128xf32>
    %37 = vector.broadcast %35 : vector<1x128xf32> to vector<8x128xf32>
    %38 = arith.addf %36, %37 : vector<8x128xf32>
    %39 = vector.extract_strided_slice %38 {offsets = [0, 0], sizes = [8, 64], strides = [1, 1]} : vector<8x128xf32> to vector<8x64xf32>
    %c0_34 = arith.constant 0 : index
    %c0_35 = arith.constant 0 : index
    %40 = vector.load %arg13[%c0_34, %c0_35] : memref<8x64xf32, #tpu.memory_space<vmem>>, vector<8x64xf32>
    tpu.vector_store %arg13[%c0_34, %c0_35], %39 {strides = array<i32>} : memref<8x64xf32, #tpu.memory_space<vmem>>, vector<8x64xf32>,
    return
  }
}

</mosaic_0001>

<llo_original>
// kernel: tpu_custom_call.1
$region0: #{tpu_custom_call.1}
  #allocation0 [shape = 'u32[]', space=smem, size = 0x4, offset = 0x4, fixed_abs, tag = 'smem constant byte address 0x4 - core index']
  #allocation1 [shape = 'u32[144,128]{1,0:T(1,128)}', space=vmem, size = 0x12000, scoped, tag = 'internal scratch']
  %s0 = inlined_call_operand.hbm [shape: f32[8,64], index: 0, kind: input, shape index: {}]
  %s1 = inlined_call_operand.hbm [shape: f32[64,128], index: 1, kind: input, shape index: {}]
  %s2 = inlined_call_operand.vmem [shape: f32[1,128], index: 2, kind: input, shape index: {}]
  %s3 = inlined_call_operand.hbm [shape: f32[128,128], index: 3, kind: input, shape index: {}]
  %s4 = inlined_call_operand.vmem [shape: f32[1,128], index: 4, kind: input, shape index: {}]
  %s5 = inlined_call_operand.hbm [shape: f32[128,128], index: 5, kind: input, shape index: {}]
  %s6 = inlined_call_operand.vmem [shape: f32[1,128], index: 6, kind: input, shape index: {}]
  %s7 = inlined_call_operand.hbm [shape: f32[128,128], index: 7, kind: input, shape index: {}]
  %s8 = inlined_call_operand.vmem [shape: f32[1,128], index: 8, kind: input, shape index: {}]
  %s9 = inlined_call_operand.hbm [shape: f32[128,128], index: 9, kind: input, shape index: {}]
  %s10 = inlined_call_operand.vmem [shape: f32[1,128], index: 10, kind: input, shape index: {}]
  %s11 = inlined_call_operand.hbm [shape: f32[128,128], index: 11, kind: input, shape index: {}]
  %s12 = inlined_call_operand.vmem [shape: f32[1,128], index: 12, kind: input, shape index: {}]
  %s13 = inlined_call_operand.hbm [shape: f32[8,64], index: 13, kind: output, shape index: {}]
  %s14 = sld [smem:[#allocation0]]
  $region90: #{tpu_custom_call.1} parent=0
    _
  %s16 = ssub.s32 1, %s14
  %s17 = scalar_select 0, %s16, %s14
  $region1: #{tpu_custom_call.1} parent=0
    #allocation2 [shape = 'u8[4096]{0}', space=vmem, size = 0x1000, scoped, tag = 'input window, operand 0, single buffered']
    #allocation3 [shape = 's32[1]{0}', space=sflag, size = 0x4, scoped, tag = 'scoped memory for tpu_custom_call.1']
    #allocation4 [shape = 's32[1]{0}', space=sflag, size = 0x4, scoped, tag = 'scoped memory for tpu_custom_call.1']
    #allocation5 [shape = 'u8[32768]{0}', space=vmem, size = 0x8000, scoped, tag = 'input window, operand 1, single buffered']
    #allocation6 [shape = 's32[1]{0}', space=sflag, size = 0x4, scoped, tag = 'scoped memory for tpu_custom_call.1']
    #allocation7 [shape = 'u8[65536]{0}', space=vmem, size = 0x10000, scoped, tag = 'input window, operand 3, single buffered']
    #allocation8 [shape = 'u8[65536]{0}', space=vmem, size = 0x10000, scoped, tag = 'input window, operand 5, single buffered']
    #allocation9 [shape = 's32[1]{0}', space=sflag, size = 0x4, scoped, tag = 'scoped memory for tpu_custom_call.1']
    #allocation10 [shape = 'u8[65536]{0}', space=vmem, size = 0x10000, scoped, tag = 'input window, operand 7, single buffered']
    #allocation11 [shape = 'u8[65536]{0}', space=vmem, size = 0x10000, scoped, tag = 'input window, operand 9, single buffered']
    #allocation12 [shape = 's32[1]{0}', space=sflag, size = 0x4, scoped, tag = 'scoped memory for tpu_custom_call.1']
    #allocation13 [shape = 'u8[65536]{0}', space=vmem, size = 0x10000, scoped, tag = 'input window, operand 11, single buffered']
    #allocation14 [shape = 'u8[4096]{0}', space=vmem, size = 0x1000, scoped, tag = 'output window, operand 0, single buffered']
    %18 = vsyncpa [#allocation3], 0
    %19 = vsyncpa [#allocation6], 0
    %20 = vsyncpa [#allocation9], 0
    %21 = vsyncpa [#allocation12], 0
    %22 = vsyncpa [#allocation4], 0
    // Predicated region
    $region2: #{tpu_custom_call.1} parent=1 // pred_check
      _
    $region3: #{tpu_custom_call.1} parent=1 // pred_check_branch
      %24 = sbr.rel (0) target = $region5
    $region4: #{tpu_custom_call.1} parent=1 // pred_region
      %s26 = ssub.s32 128, 128
      %27 = vsyncadd [#allocation3], %s26
      %s29 = sshll.u32 [#allocation2], 4
      %s30 = int_to_ptr.vmem [resolvable:$true] %s29
      %32 = dma.hbm_to_vmem [thread:$0]  %s0, 128, %s30, [#allocation3]
    $region5: #{tpu_custom_call.1} parent=1 // pred_fallthru
      _
    // Predicated region
    $region6: #{tpu_custom_call.1} parent=1 // pred_check
      _
    $region7: #{tpu_custom_call.1} parent=1 // pred_check_branch
      %34 = sbr.rel (0) target = $region9
    $region8: #{tpu_custom_call.1} parent=1 // pred_region
      %s36 = ssub.s32 1024, 1024
      %37 = vsyncadd [#allocation6], %s36
      %s38 = sshll.u32 [#allocation5], 4
      %s39 = int_to_ptr.vmem [resolvable:$true] %s38
      %44 = dma.hbm_to_vmem [thread:$0]  %s1, 1024, %s39, [#allocation6], 128, 128, 8
    $region9: #{tpu_custom_call.1} parent=1 // pred_fallthru
      _
    // Predicated region
    $region10: #{tpu_custom_call.1} parent=1 // pred_check
      _
    $region11: #{tpu_custom_call.1} parent=1 // pred_check_branch
      %46 = sbr.rel (0) target = $region13
    $region12: #{tpu_custom_call.1} parent=1 // pred_region
      _
    $region13: #{tpu_custom_call.1} parent=1 // pred_fallthru
      _
    // Predicated region
    $region14: #{tpu_custom_call.1} parent=1 // pred_check
      _
    $region15: #{tpu_custom_call.1} parent=1 // pred_check_branch
      %48 = sbr.rel (0) target = $region17
    $region16: #{tpu_custom_call.1} parent=1 // pred_region
      %s50 = ssub.s32 2048, 2048
      %51 = vsyncadd [#allocation6], %s50
      %s52 = sshll.u32 [#allocation7], 4
      %s53 = int_to_ptr.vmem [resolvable:$true] %s52
      %58 = dma.hbm_to_vmem [thread:$0]  %s3, 2048, %s53, [#allocation6], 128, 128, 8
    $region17: #{tpu_custom_call.1} parent=1 // pred_fallthru
      _
    // Predicated region
    $region18: #{tpu_custom_call.1} parent=1 // pred_check
      _
    $region19: #{tpu_custom_call.1} parent=1 // pred_check_branch
      %60 = sbr.rel (0) target = $region21
    $region20: #{tpu_custom_call.1} parent=1 // pred_region
      _
    $region21: #{tpu_custom_call.1} parent=1 // pred_fallthru
      _
    // Predicated region
    $region22: #{tpu_custom_call.1} parent=1 // pred_check
      _
    $region23: #{tpu_custom_call.1} parent=1 // pred_check_branch
      %62 = sbr.rel (0) target = $region25
    $region24: #{tpu_custom_call.1} parent=1 // pred_region
      %s64 = ssub.s32 2048, 2048
      %65 = vsyncadd [#allocation9], %s64
      %s66 = sshll.u32 [#allocation8], 4
      %s67 = int_to_ptr.vmem [resolvable:$true] %s66
      %72 = dma.hbm_to_vmem [thread:$0]  %s5, 2048, %s67, [#allocation9], 128, 128, 8
    $region25: #{tpu_custom_call.1} parent=1 // pred_fallthru
      _
    // Predicated region
    $region26: #{tpu_custom_call.1} parent=1 // pred_check
      _
    $region27: #{tpu_custom_call.1} parent=1 // pred_check_branch
      %74 = sbr.rel (0) target = $region29
    $region28: #{tpu_custom_call.1} parent=1 // pred_region
      _
    $region29: #{tpu_custom_call.1} parent=1 // pred_fallthru
      _
    // Predicated region
    $region30: #{tpu_custom_call.1} parent=1 // pred_check
      _
    $region31: #{tpu_custom_call.1} parent=1 // pred_check_branch
      %76 = sbr.rel (0) target = $region33
    $region32: #{tpu_custom_call.1} parent=1 // pred_region
      %s78 = ssub.s32 2048, 2048
      %79 = vsyncadd [#allocation9], %s78
      %s80 = sshll.u32 [#allocation10], 4
      %s81 = int_to_ptr.vmem [resolvable:$true] %s80
      %86 = dma.hbm_to_vmem [thread:$0]  %s7, 2048, %s81, [#allocation9], 128, 128, 8
    $region33: #{tpu_custom_call.1} parent=1 // pred_fallthru
      _
    // Predicated region
    $region34: #{tpu_custom_call.1} parent=1 // pred_check
      _
    $region35: #{tpu_custom_call.1} parent=1 // pred_check_branch
      %88 = sbr.rel (0) target = $region37
    $region36: #{tpu_custom_call.1} parent=1 // pred_region
      _
    $region37: #{tpu_custom_call.1} parent=1 // pred_fallthru
      _
    // Predicated region
    $region38: #{tpu_custom_call.1} parent=1 // pred_check
      _
    $region39: #{tpu_custom_call.1} parent=1 // pred_check_branch
      %90 = sbr.rel (0) target = $region41
    $region40: #{tpu_custom_call.1} parent=1 // pred_region
      %s92 = ssub.s32 2048, 2048
      %93 = vsyncadd [#allocation12], %s92
      %s94 = sshll.u32 [#allocation11], 4
      %s95 = int_to_ptr.vmem [resolvable:$true] %s94
      %100 = dma.hbm_to_vmem [thread:$0]  %s9, 2048, %s95, [#allocation12], 128, 128, 8
    $region41: #{tpu_custom_call.1} parent=1 // pred_fallthru
      _
    // Predicated region
    $region42: #{tpu_custom_call.1} parent=1 // pred_check
      _
    $region43: #{tpu_custom_call.1} parent=1 // pred_check_branch
      %102 = sbr.rel (0) target = $region45
    $region44: #{tpu_custom_call.1} parent=1 // pred_region
      _
    $region45: #{tpu_custom_call.1} parent=1 // pred_fallthru
      _
    // Predicated region
    $region46: #{tpu_custom_call.1} parent=1 // pred_check
      _
    $region47: #{tpu_custom_call.1} parent=1 // pred_check_branch
      %104 = sbr.rel (0) target = $region49
    $region48: #{tpu_custom_call.1} parent=1 // pred_region
      %s106 = ssub.s32 2048, 2048
      %107 = vsyncadd [#allocation12], %s106
      %s108 = sshll.u32 [#allocation13], 4
      %s109 = int_to_ptr.vmem [resolvable:$true] %s108
      %114 = dma.hbm_to_vmem [thread:$0]  %s11, 2048, %s109, [#allocation12], 128, 128, 8
    $region49: #{tpu_custom_call.1} parent=1 // pred_fallthru
      _
    // Predicated region
    $region50: #{tpu_custom_call.1} parent=1 // pred_check
      _
    $region51: #{tpu_custom_call.1} parent=1 // pred_check_branch
      %116 = sbr.rel (0) target = $region53
    $region52: #{tpu_custom_call.1} parent=1 // pred_region
      _
    $region53: #{tpu_custom_call.1} parent=1 // pred_fallthru
      _
    // Predicated region
    $region54: #{tpu_custom_call.1} parent=1 // pred_check
      _
    $region55: #{tpu_custom_call.1} parent=1 // pred_check_branch
      %118 = sbr.rel (0) target = $region57
    $region56: #{tpu_custom_call.1} parent=1 // pred_region
      %119 = dma.done [#allocation3], 128
    $region57: #{tpu_custom_call.1} parent=1 // pred_fallthru
      _
    // Predicated region
    $region58: #{tpu_custom_call.1} parent=1 // pred_check
      _
    $region59: #{tpu_custom_call.1} parent=1 // pred_check_branch
      %121 = sbr.rel (0) target = $region61
    $region60: #{tpu_custom_call.1} parent=1 // pred_region
      %122 = dma.done [#allocation6], 1024
    $region61: #{tpu_custom_call.1} parent=1 // pred_fallthru
      _
    // Predicated region
    $region62: #{tpu_custom_call.1} parent=1 // pred_check
      _
    $region63: #{tpu_custom_call.1} parent=1 // pred_check_branch
      %124 = sbr.rel (0) target = $region65
    $region64: #{tpu_custom_call.1} parent=1 // pred_region
      %125 = dma.done [#allocation6], 2048
    $region65: #{tpu_custom_call.1} parent=1 // pred_fallthru
      _
    // Predicated region
    $region66: #{tpu_custom_call.1} parent=1 // pred_check
      _
    $region67: #{tpu_custom_call.1} parent=1 // pred_check_branch
      %127 = sbr.rel (0) target = $region69
    $region68: #{tpu_custom_call.1} parent=1 // pred_region
      %128 = dma.done [#allocation9], 2048
    $region69: #{tpu_custom_call.1} parent=1 // pred_fallthru
      _
    // Predicated region
    $region70: #{tpu_custom_call.1} parent=1 // pred_check
      _
    $region71: #{tpu_custom_call.1} parent=1 // pred_check_branch
      %130 = sbr.rel (0) target = $region73
    $region72: #{tpu_custom_call.1} parent=1 // pred_region
      %131 = dma.done [#allocation9], 2048
    $region73: #{tpu_custom_call.1} parent=1 // pred_fallthru
      _
    // Predicated region
    $region74: #{tpu_custom_call.1} parent=1 // pred_check
      _
    $region75: #{tpu_custom_call.1} parent=1 // pred_check_branch
      %133 = sbr.rel (0) target = $region77
    $region76: #{tpu_custom_call.1} parent=1 // pred_region
      %134 = dma.done [#allocation12], 2048
    $region77: #{tpu_custom_call.1} parent=1 // pred_fallthru
      _
    // Predicated region
    $region78: #{tpu_custom_call.1} parent=1 // pred_check
      _
    $region79: #{tpu_custom_call.1} parent=1 // pred_check_branch
      %136 = sbr.rel (0) target = $region81
    $region80: #{tpu_custom_call.1} parent=1 // pred_region
      %137 = dma.done [#allocation12], 2048
    $region81: #{tpu_custom_call.1} parent=1 // pred_fallthru
      _
    %v138 = vld [vmem:[#allocation2] sm:$0xff]
    %v139 = vld [vmem:[#allocation5] sm:$0xff]
    %v140 = vld [vmem:[#allocation5 + $0x8] sm:$0xff]
    %v141 = vld [vmem:[#allocation5 + $0x10] sm:$0xff]
    %v142 = vld [vmem:[#allocation5 + $0x18] sm:$0xff]
    %v143 = vld [vmem:[#allocation5 + $0x20] sm:$0xff]
    %v144 = vld [vmem:[#allocation5 + $0x28] sm:$0xff]
    %v145 = vld [vmem:[#allocation5 + $0x30] sm:$0xff]
    %v146 = vld [vmem:[#allocation5 + $0x38] sm:$0xff]
    %v147 = vld [vmem:[%s2] sm:$0x1]
    %v149 = vlaneseq
    %v150 = vshrl.u32 %v149, 7
    %v151 = vsub.s32 0, %v150
    %v152 = vrot.slane %v147, %v151
    %vm154 = vcmask 523264
    %v156 = vsel %vm154, %v138, 0
    %158 = vmatprep.subr.mxu0 0.0
    %159 = vmatpush1.msra.mxu0 %v139
    %160 = vmatprep.subr.mxu0 0.0
    %161 = vmatpush1.msra.mxu0 %v140
    %162 = vmatprep.subr.mxu0 0.0
    %163 = vmatpush1.msra.mxu0 %v141
    %164 = vmatprep.subr.mxu0 0.0
    %165 = vmatpush1.msra.mxu0 %v142
    %166 = vmatprep.subr.mxu0 0.0
    %167 = vmatpush1.msra.mxu0 %v143
    %168 = vmatprep.subr.mxu0 0.0
    %169 = vmatpush1.msra.mxu0 %v144
    %170 = vmatprep.subr.mxu0 0.0
    %171 = vmatpush1.msra.mxu0 %v145
    %172 = vmatprep.subr.mxu0 0.0
    %173 = vmatpush1.msra.mxu0 %v146
    %174 = vmatprep.subr.mxu0 0.0
    %175 = vmatpush1.msra.mxu0 0.0
    %176 = vmatprep.subr.mxu0 0.0
    %177 = vmatpush1.msra.mxu0 0.0
    %178 = vmatprep.subr.mxu0 0.0
    %179 = vmatpush1.msra.mxu0 0.0
    %180 = vmatprep.subr.mxu0 0.0
    %181 = vmatpush1.msra.mxu0 0.0
    %182 = vmatprep.subr.mxu0 0.0
    %183 = vmatpush1.msra.mxu0 0.0
    %184 = vmatprep.subr.mxu0 0.0
    %185 = vmatpush1.msra.mxu0 0.0
    %186 = vmatprep.subr.mxu0 0.0
    %187 = vmatpush1.msra.mxu0 0.0
    %188 = vmatprep.subr.mxu0 0.0
    %189 = vmatpush1.msra.mxu0 0.0
    %190 = vmatprep.subr.mxu0 0.0
    %191 = vmatpush1.msra.mxu0 0.0
    %192 = vmatprep.subr.mxu0 0.0
    %193 = vmatpush1.msra.mxu0 0.0
    %194 = vmatprep.subr.mxu0 0.0
    %195 = vmatpush1.msra.mxu0 0.0
    %196 = vmatprep.subr.mxu0 0.0
    %197 = vmatpush1.msra.mxu0 0.0
    %198 = vmatprep.subr.mxu0 0.0
    %199 = vmatpush1.msra.mxu0 0.0
    %200 = vmatprep.subr.mxu0 0.0
    %201 = vmatpush1.msra.mxu0 0.0
    %202 = vmatprep.subr.mxu0 0.0
    %203 = vmatpush1.msra.mxu0 0.0
    %204 = vmatprep.subr.mxu0 0.0
    %205 = vmatpush1.msra.mxu0 0.0
    %206 = vmatprep.subr.mxu0 0.0
    %207 = vmatpush1.msra.mxu0 0.0
    %208 = vmatprep.subr.mxu0 0.0
    %209 = vmatpush1.msra.mxu0 0.0
    %210 = vmatprep.subr.mxu0 0.0
    %211 = vmatpush1.msra.mxu0 0.0
    %212 = vmatprep.subr.mxu0 0.0
    %213 = vmatpush1.msra.mxu0 0.0
    %214 = vmatprep.subr.mxu0 0.0
    %215 = vmatpush1.msra.mxu0 0.0
    %216 = vmatprep.subr.mxu0 0.0
    %217 = vmatpush1.msra.mxu0 0.0
    %218 = vmatprep.subr.mxu0 0.0
    %219 = vmatpush1.msra.mxu0 0.0
    %220 = vmatprep.subr.mxu0 0.0
    %221 = vmatpush1.msra.mxu0 0.0
    %222 = vmatprep.mubr.f32.mxu0 0.0
    %223 = vmatmul.mubr.f32.gmra.mrb[0].mxu0 %v156
    %v224 = vpop.f32.mrb[0].mxu0
    %v225 = vadd.f32 %v152, %v224
    %v226 = vpop.f32.mrb[0].mxu0
    %227 = vdwg.mxu0
    %v228 = vmax.f32 %v225, 0.0
    %v229 = vld [vmem:[#allocation7] sm:$0xff]
    %v230 = vld [vmem:[#allocation7 + $0x8] sm:$0xff]
    %v231 = vld [vmem:[#allocation7 + $0x10] sm:$0xff]
    %v232 = vld [vmem:[#allocation7 + $0x18] sm:$0xff]
    %v233 = vld [vmem:[#allocation7 + $0x20] sm:$0xff]
    %v234 = vld [vmem:[#allocation7 + $0x28] sm:$0xff]
    %v235 = vld [vmem:[#allocation7 + $0x30] sm:$0xff]
    %v236 = vld [vmem:[#allocation7 + $0x38] sm:$0xff]
    %v237 = vld [vmem:[#allocation7 + $0x40] sm:$0xff]
    %v238 = vld [vmem:[#allocation7 + $0x48] sm:$0xff]
    %v239 = vld [vmem:[#allocation7 + $0x50] sm:$0xff]
    %v240 = vld [vmem:[#allocation7 + $0x58] sm:$0xff]
    %v241 = vld [vmem:[#allocation7 + $0x60] sm:$0xff]
    %v242 = vld [vmem:[#allocation7 + $0x68] sm:$0xff]
    %v243 = vld [vmem:[#allocation7 + $0x70] sm:$0xff]
    %v244 = vld [vmem:[#allocation7 + $0x78] sm:$0xff]
    %v245 = vld [vmem:[%s4] sm:$0x1]
    %v247 = vlaneseq
    %v248 = vshrl.u32 %v247, 7
    %v249 = vsub.s32 0, %v248
    %v250 = vrot.slane %v245, %v249
    %252 = vmatprep.subr.mxu0 0.0
    %253 = vmatpush1.msra.mxu0 %v229
    %254 = vmatprep.subr.mxu0 0.0
    %255 = vmatpush1.msra.mxu0 %v230
    %256 = vmatprep.subr.mxu0 0.0
    %257 = vmatpush1.msra.mxu0 %v231
    %258 = vmatprep.subr.mxu0 0.0
    %259 = vmatpush1.msra.mxu0 %v232
    %260 = vmatprep.subr.mxu0 0.0
    %261 = vmatpush1.msra.mxu0 %v233
    %262 = vmatprep.subr.mxu0 0.0
    %263 = vmatpush1.msra.mxu0 %v234
    %264 = vmatprep.subr.mxu0 0.0
    %265 = vmatpush1.msra.mxu0 %v235
    %266 = vmatprep.subr.mxu0 0.0
    %267 = vmatpush1.msra.mxu0 %v236
    %268 = vmatprep.subr.mxu0 0.0
    %269 = vmatpush1.msra.mxu0 %v237
    %270 = vmatprep.subr.mxu0 0.0
    %271 = vmatpush1.msra.mxu0 %v238
    %272 = vmatprep.subr.mxu0 0.0
    %273 = vmatpush1.msra.mxu0 %v239
    %274 = vmatprep.subr.mxu0 0.0
    %275 = vmatpush1.msra.mxu0 %v240
    %276 = vmatprep.subr.mxu0 0.0
    %277 = vmatpush1.msra.mxu0 %v241
    %278 = vmatprep.subr.mxu0 0.0
    %279 = vmatpush1.msra.mxu0 %v242
    %280 = vmatprep.subr.mxu0 0.0
    %281 = vmatpush1.msra.mxu0 %v243
    %282 = vmatprep.subr.mxu0 0.0
    %283 = vmatpush1.msra.mxu0 %v244
    %284 = vmatprep.subr.mxu0 0.0
    %285 = vmatpush1.msra.mxu0 0.0
    %286 = vmatprep.subr.mxu0 0.0
    %287 = vmatpush1.msra.mxu0 0.0
    %288 = vmatprep.subr.mxu0 0.0
    %289 = vmatpush1.msra.mxu0 0.0
    %290 = vmatprep.subr.mxu0 0.0
    %291 = vmatpush1.msra.mxu0 0.0
    %292 = vmatprep.subr.mxu0 0.0
    %293 = vmatpush1.msra.mxu0 0.0
    %294 = vmatprep.subr.mxu0 0.0
    %295 = vmatpush1.msra.mxu0 0.0
    %296 = vmatprep.subr.mxu0 0.0
    %297 = vmatpush1.msra.mxu0 0.0
    %298 = vmatprep.subr.mxu0 0.0
    %299 = vmatpush1.msra.mxu0 0.0
    %300 = vmatprep.subr.mxu0 0.0
    %301 = vmatpush1.msra.mxu0 0.0
    %302 = vmatprep.subr.mxu0 0.0
    %303 = vmatpush1.msra.mxu0 0.0
    %304 = vmatprep.subr.mxu0 0.0
    %305 = vmatpush1.msra.mxu0 0.0
    %306 = vmatprep.subr.mxu0 0.0
    %307 = vmatpush1.msra.mxu0 0.0
    %308 = vmatprep.subr.mxu0 0.0
    %309 = vmatpush1.msra.mxu0 0.0
    %310 = vmatprep.subr.mxu0 0.0
    %311 = vmatpush1.msra.mxu0 0.0
    %312 = vmatprep.subr.mxu0 0.0
    %313 = vmatpush1.msra.mxu0 0.0
    %314 = vmatprep.subr.mxu0 0.0
    %315 = vmatpush1.msra.mxu0 0.0
    %316 = vmatprep.mubr.f32.mxu0 0.0
    %317 = vmatmul.mubr.f32.gmra.mrb[0].mxu0 %v228
    %v318 = vpop.f32.mrb[0].mxu0
    %v319 = vadd.f32 %v250, %v318
    %v320 = vpop.f32.mrb[0].mxu0
    %321 = vdwg.mxu0
    %v322 = vmax.f32 %v319, 0.0
    %v323 = vld [vmem:[#allocation8] sm:$0xff]
    %v324 = vld [vmem:[#allocation8 + $0x8] sm:$0xff]
    %v325 = vld [vmem:[#allocation8 + $0x10] sm:$0xff]
    %v326 = vld [vmem:[#allocation8 + $0x18] sm:$0xff]
    %v327 = vld [vmem:[#allocation8 + $0x20] sm:$0xff]
    %v328 = vld [vmem:[#allocation8 + $0x28] sm:$0xff]
    %v329 = vld [vmem:[#allocation8 + $0x30] sm:$0xff]
    %v330 = vld [vmem:[#allocation8 + $0x38] sm:$0xff]
    %v331 = vld [vmem:[#allocation8 + $0x40] sm:$0xff]
    %v332 = vld [vmem:[#allocation8 + $0x48] sm:$0xff]
    %v333 = vld [vmem:[#allocation8 + $0x50] sm:$0xff]
    %v334 = vld [vmem:[#allocation8 + $0x58] sm:$0xff]
    %v335 = vld [vmem:[#allocation8 + $0x60] sm:$0xff]
    %v336 = vld [vmem:[#allocation8 + $0x68] sm:$0xff]
    %v337 = vld [vmem:[#allocation8 + $0x70] sm:$0xff]
    %v338 = vld [vmem:[#allocation8 + $0x78] sm:$0xff]
    %v339 = vld [vmem:[%s6] sm:$0x1]
    %v341 = vlaneseq
    %v342 = vshrl.u32 %v341, 7
    %v343 = vsub.s32 0, %v342
    %v344 = vrot.slane %v339, %v343
    %346 = vmatprep.subr.mxu0 0.0
    %347 = vmatpush1.msra.mxu0 %v323
    %348 = vmatprep.subr.mxu0 0.0
    %349 = vmatpush1.msra.mxu0 %v324
    %350 = vmatprep.subr.mxu0 0.0
    %351 = vmatpush1.msra.mxu0 %v325
    %352 = vmatprep.subr.mxu0 0.0
    %353 = vmatpush1.msra.mxu0 %v326
    %354 = vmatprep.subr.mxu0 0.0
    %355 = vmatpush1.msra.mxu0 %v327
    %356 = vmatprep.subr.mxu0 0.0
    %357 = vmatpush1.msra.mxu0 %v328
    %358 = vmatprep.subr.mxu0 0.0
    %359 = vmatpush1.msra.mxu0 %v329
    %360 = vmatprep.subr.mxu0 0.0
    %361 = vmatpush1.msra.mxu0 %v330
    %362 = vmatprep.subr.mxu0 0.0
    %363 = vmatpush1.msra.mxu0 %v331
    %364 = vmatprep.subr.mxu0 0.0
    %365 = vmatpush1.msra.mxu0 %v332
    %366 = vmatprep.subr.mxu0 0.0
    %367 = vmatpush1.msra.mxu0 %v333
    %368 = vmatprep.subr.mxu0 0.0
    %369 = vmatpush1.msra.mxu0 %v334
    %370 = vmatprep.subr.mxu0 0.0
    %371 = vmatpush1.msra.mxu0 %v335
    %372 = vmatprep.subr.mxu0 0.0
    %373 = vmatpush1.msra.mxu0 %v336
    %374 = vmatprep.subr.mxu0 0.0
    %375 = vmatpush1.msra.mxu0 %v337
    %376 = vmatprep.subr.mxu0 0.0
    %377 = vmatpush1.msra.mxu0 %v338
    %378 = vmatprep.subr.mxu0 0.0
    %379 = vmatpush1.msra.mxu0 0.0
    %380 = vmatprep.subr.mxu0 0.0
    %381 = vmatpush1.msra.mxu0 0.0
    %382 = vmatprep.subr.mxu0 0.0
    %383 = vmatpush1.msra.mxu0 0.0
    %384 = vmatprep.subr.mxu0 0.0
    %385 = vmatpush1.msra.mxu0 0.0
    %386 = vmatprep.subr.mxu0 0.0
    %387 = vmatpush1.msra.mxu0 0.0
    %388 = vmatprep.subr.mxu0 0.0
    %389 = vmatpush1.msra.mxu0 0.0
    %390 = vmatprep.subr.mxu0 0.0
    %391 = vmatpush1.msra.mxu0 0.0
    %392 = vmatprep.subr.mxu0 0.0
    %393 = vmatpush1.msra.mxu0 0.0
    %394 = vmatprep.subr.mxu0 0.0
    %395 = vmatpush1.msra.mxu0 0.0
    %396 = vmatprep.subr.mxu0 0.0
    %397 = vmatpush1.msra.mxu0 0.0
    %398 = vmatprep.subr.mxu0 0.0
    %399 = vmatpush1.msra.mxu0 0.0
    %400 = vmatprep.subr.mxu0 0.0
    %401 = vmatpush1.msra.mxu0 0.0
    %402 = vmatprep.subr.mxu0 0.0
    %403 = vmatpush1.msra.mxu0 0.0
    %404 = vmatprep.subr.mxu0 0.0
    %405 = vmatpush1.msra.mxu0 0.0
    %406 = vmatprep.subr.mxu0 0.0
    %407 = vmatpush1.msra.mxu0 0.0
    %408 = vmatprep.subr.mxu0 0.0
    %409 = vmatpush1.msra.mxu0 0.0
    %410 = vmatprep.mubr.f32.mxu0 0.0
    %411 = vmatmul.mubr.f32.gmra.mrb[0].mxu0 %v322
    %v412 = vpop.f32.mrb[0].mxu0
    %v413 = vadd.f32 %v344, %v412
    %v414 = vpop.f32.mrb[0].mxu0
    %415 = vdwg.mxu0
    %v416 = vld [vmem:[#allocation10] sm:$0xff]
    %v417 = vld [vmem:[#allocation10 + $0x8] sm:$0xff]
    %v418 = vld [vmem:[#allocation10 + $0x10] sm:$0xff]
    %v419 = vld [vmem:[#allocation10 + $0x18] sm:$0xff]
    %v420 = vld [vmem:[#allocation10 + $0x20] sm:$0xff]
    %v421 = vld [vmem:[#allocation10 + $0x28] sm:$0xff]
    %v422 = vld [vmem:[#allocation10 + $0x30] sm:$0xff]
    %v423 = vld [vmem:[#allocation10 + $0x38] sm:$0xff]
    %v424 = vld [vmem:[#allocation10 + $0x40] sm:$0xff]
    %v425 = vld [vmem:[#allocation10 + $0x48] sm:$0xff]
    %v426 = vld [vmem:[#allocation10 + $0x50] sm:$0xff]
    %v427 = vld [vmem:[#allocation10 + $0x58] sm:$0xff]
    %v428 = vld [vmem:[#allocation10 + $0x60] sm:$0xff]
    %v429 = vld [vmem:[#allocation10 + $0x68] sm:$0xff]
    %v430 = vld [vmem:[#allocation10 + $0x70] sm:$0xff]
    %v431 = vld [vmem:[#allocation10 + $0x78] sm:$0xff]
    %v432 = vld [vmem:[%s8] sm:$0x1]
    %v434 = vlaneseq
    %v435 = vshrl.u32 %v434, 7
    %v436 = vsub.s32 0, %v435
    %v437 = vrot.slane %v432, %v436
    %439 = vmatprep.subr.mxu0 0.0
    %440 = vmatpush1.msra.mxu0 %v416
    %441 = vmatprep.subr.mxu0 0.0
    %442 = vmatpush1.msra.mxu0 %v417
    %443 = vmatprep.subr.mxu0 0.0
    %444 = vmatpush1.msra.mxu0 %v418
    %445 = vmatprep.subr.mxu0 0.0
    %446 = vmatpush1.msra.mxu0 %v419
    %447 = vmatprep.subr.mxu0 0.0
    %448 = vmatpush1.msra.mxu0 %v420
    %449 = vmatprep.subr.mxu0 0.0
    %450 = vmatpush1.msra.mxu0 %v421
    %451 = vmatprep.subr.mxu0 0.0
    %452 = vmatpush1.msra.mxu0 %v422
    %453 = vmatprep.subr.mxu0 0.0
    %454 = vmatpush1.msra.mxu0 %v423
    %455 = vmatprep.subr.mxu0 0.0
    %456 = vmatpush1.msra.mxu0 %v424
    %457 = vmatprep.subr.mxu0 0.0
    %458 = vmatpush1.msra.mxu0 %v425
    %459 = vmatprep.subr.mxu0 0.0
    %460 = vmatpush1.msra.mxu0 %v426
    %461 = vmatprep.subr.mxu0 0.0
    %462 = vmatpush1.msra.mxu0 %v427
    %463 = vmatprep.subr.mxu0 0.0
    %464 = vmatpush1.msra.mxu0 %v428
    %465 = vmatprep.subr.mxu0 0.0
    %466 = vmatpush1.msra.mxu0 %v429
    %467 = vmatprep.subr.mxu0 0.0
    %468 = vmatpush1.msra.mxu0 %v430
    %469 = vmatprep.subr.mxu0 0.0
    %470 = vmatpush1.msra.mxu0 %v431
    %471 = vmatprep.subr.mxu0 0.0
    %472 = vmatpush1.msra.mxu0 0.0
    %473 = vmatprep.subr.mxu0 0.0
    %474 = vmatpush1.msra.mxu0 0.0
    %475 = vmatprep.subr.mxu0 0.0
    %476 = vmatpush1.msra.mxu0 0.0
    %477 = vmatprep.subr.mxu0 0.0
    %478 = vmatpush1.msra.mxu0 0.0
    %479 = vmatprep.subr.mxu0 0.0
    %480 = vmatpush1.msra.mxu0 0.0
    %481 = vmatprep.subr.mxu0 0.0
    %482 = vmatpush1.msra.mxu0 0.0
    %483 = vmatprep.subr.mxu0 0.0
    %484 = vmatpush1.msra.mxu0 0.0
    %485 = vmatprep.subr.mxu0 0.0
    %486 = vmatpush1.msra.mxu0 0.0
    %487 = vmatprep.subr.mxu0 0.0
    %488 = vmatpush1.msra.mxu0 0.0
    %489 = vmatprep.subr.mxu0 0.0
    %490 = vmatpush1.msra.mxu0 0.0
    %491 = vmatprep.subr.mxu0 0.0
    %492 = vmatpush1.msra.mxu0 0.0
    %493 = vmatprep.subr.mxu0 0.0
    %494 = vmatpush1.msra.mxu0 0.0
    %495 = vmatprep.subr.mxu0 0.0
    %496 = vmatpush1.msra.mxu0 0.0
    %497 = vmatprep.subr.mxu0 0.0
    %498 = vmatpush1.msra.mxu0 0.0
    %499 = vmatprep.subr.mxu0 0.0
    %500 = vmatpush1.msra.mxu0 0.0
    %501 = vmatprep.subr.mxu0 0.0
    %502 = vmatpush1.msra.mxu0 0.0
    %503 = vmatprep.mubr.f32.mxu0 0.0
    %504 = vmatmul.mubr.f32.gmra.mrb[0].mxu0 %v413
    %v505 = vpop.f32.mrb[0].mxu0
    %v506 = vadd.f32 %v437, %v505
    %v507 = vpop.f32.mrb[0].mxu0
    %508 = vdwg.mxu0
    %v509 = vmax.f32 %v506, 0.0
    %v510 = vld [vmem:[#allocation11] sm:$0xff]
    %v511 = vld [vmem:[#allocation11 + $0x8] sm:$0xff]
    %v512 = vld [vmem:[#allocation11 + $0x10] sm:$0xff]
    %v513 = vld [vmem:[#allocation11 + $0x18] sm:$0xff]
    %v514 = vld [vmem:[#allocation11 + $0x20] sm:$0xff]
    %v515 = vld [vmem:[#allocation11 + $0x28] sm:$0xff]
    %v516 = vld [vmem:[#allocation11 + $0x30] sm:$0xff]
    %v517 = vld [vmem:[#allocation11 + $0x38] sm:$0xff]
    %v518 = vld [vmem:[#allocation11 + $0x40] sm:$0xff]
    %v519 = vld [vmem:[#allocation11 + $0x48] sm:$0xff]
    %v520 = vld [vmem:[#allocation11 + $0x50] sm:$0xff]
    %v521 = vld [vmem:[#allocation11 + $0x58] sm:$0xff]
    %v522 = vld [vmem:[#allocation11 + $0x60] sm:$0xff]
    %v523 = vld [vmem:[#allocation11 + $0x68] sm:$0xff]
    %v524 = vld [vmem:[#allocation11 + $0x70] sm:$0xff]
    %v525 = vld [vmem:[#allocation11 + $0x78] sm:$0xff]
    %v526 = vld [vmem:[%s10] sm:$0x1]
    %v528 = vlaneseq
    %v529 = vshrl.u32 %v528, 7
    %v530 = vsub.s32 0, %v529
    %v531 = vrot.slane %v526, %v530
    %533 = vmatprep.subr.mxu0 0.0
    %534 = vmatpush1.msra.mxu0 %v510
    %535 = vmatprep.subr.mxu0 0.0
    %536 = vmatpush1.msra.mxu0 %v511
    %537 = vmatprep.subr.mxu0 0.0
    %538 = vmatpush1.msra.mxu0 %v512
    %539 = vmatprep.subr.mxu0 0.0
    %540 = vmatpush1.msra.mxu0 %v513
    %541 = vmatprep.subr.mxu0 0.0
    %542 = vmatpush1.msra.mxu0 %v514
    %543 = vmatprep.subr.mxu0 0.0
    %544 = vmatpush1.msra.mxu0 %v515
    %545 = vmatprep.subr.mxu0 0.0
    %546 = vmatpush1.msra.mxu0 %v516
    %547 = vmatprep.subr.mxu0 0.0
    %548 = vmatpush1.msra.mxu0 %v517
    %549 = vmatprep.subr.mxu0 0.0
    %550 = vmatpush1.msra.mxu0 %v518
    %551 = vmatprep.subr.mxu0 0.0
    %552 = vmatpush1.msra.mxu0 %v519
    %553 = vmatprep.subr.mxu0 0.0
    %554 = vmatpush1.msra.mxu0 %v520
    %555 = vmatprep.subr.mxu0 0.0
    %556 = vmatpush1.msra.mxu0 %v521
    %557 = vmatprep.subr.mxu0 0.0
    %558 = vmatpush1.msra.mxu0 %v522
    %559 = vmatprep.subr.mxu0 0.0
    %560 = vmatpush1.msra.mxu0 %v523
    %561 = vmatprep.subr.mxu0 0.0
    %562 = vmatpush1.msra.mxu0 %v524
    %563 = vmatprep.subr.mxu0 0.0
    %564 = vmatpush1.msra.mxu0 %v525
    %565 = vmatprep.subr.mxu0 0.0
    %566 = vmatpush1.msra.mxu0 0.0
    %567 = vmatprep.subr.mxu0 0.0
    %568 = vmatpush1.msra.mxu0 0.0
    %569 = vmatprep.subr.mxu0 0.0
    %570 = vmatpush1.msra.mxu0 0.0
    %571 = vmatprep.subr.mxu0 0.0
    %572 = vmatpush1.msra.mxu0 0.0
    %573 = vmatprep.subr.mxu0 0.0
    %574 = vmatpush1.msra.mxu0 0.0
    %575 = vmatprep.subr.mxu0 0.0
    %576 = vmatpush1.msra.mxu0 0.0
    %577 = vmatprep.subr.mxu0 0.0
    %578 = vmatpush1.msra.mxu0 0.0
    %579 = vmatprep.subr.mxu0 0.0
    %580 = vmatpush1.msra.mxu0 0.0
    %581 = vmatprep.subr.mxu0 0.0
    %582 = vmatpush1.msra.mxu0 0.0
    %583 = vmatprep.subr.mxu0 0.0
    %584 = vmatpush1.msra.mxu0 0.0
    %585 = vmatprep.subr.mxu0 0.0
    %586 = vmatpush1.msra.mxu0 0.0
    %587 = vmatprep.subr.mxu0 0.0
    %588 = vmatpush1.msra.mxu0 0.0
    %589 = vmatprep.subr.mxu0 0.0
    %590 = vmatpush1.msra.mxu0 0.0
    %591 = vmatprep.subr.mxu0 0.0
    %592 = vmatpush1.msra.mxu0 0.0
    %593 = vmatprep.subr.mxu0 0.0
    %594 = vmatpush1.msra.mxu0 0.0
    %595 = vmatprep.subr.mxu0 0.0
    %596 = vmatpush1.msra.mxu0 0.0
    %597 = vmatprep.mubr.f32.mxu0 0.0
    %598 = vmatmul.mubr.f32.gmra.mrb[0].mxu0 %v509
    %v599 = vpop.f32.mrb[0].mxu0
    %v600 = vadd.f32 %v531, %v599
    %v601 = vpop.f32.mrb[0].mxu0
    %602 = vdwg.mxu0
    %v603 = vmax.f32 %v600, 0.0
    %v604 = vld [vmem:[#allocation13] sm:$0xff]
    %v605 = vld [vmem:[#allocation13 + $0x8] sm:$0xff]
    %v606 = vld [vmem:[#allocation13 + $0x10] sm:$0xff]
    %v607 = vld [vmem:[#allocation13 + $0x18] sm:$0xff]
    %v608 = vld [vmem:[#allocation13 + $0x20] sm:$0xff]
    %v609 = vld [vmem:[#allocation13 + $0x28] sm:$0xff]
    %v610 = vld [vmem:[#allocation13 + $0x30] sm:$0xff]
    %v611 = vld [vmem:[#allocation13 + $0x38] sm:$0xff]
    %v612 = vld [vmem:[#allocation13 + $0x40] sm:$0xff]
    %v613 = vld [vmem:[#allocation13 + $0x48] sm:$0xff]
    %v614 = vld [vmem:[#allocation13 + $0x50] sm:$0xff]
    %v615 = vld [vmem:[#allocation13 + $0x58] sm:$0xff]
    %v616 = vld [vmem:[#allocation13 + $0x60] sm:$0xff]
    %v617 = vld [vmem:[#allocation13 + $0x68] sm:$0xff]
    %v618 = vld [vmem:[#allocation13 + $0x70] sm:$0xff]
    %v619 = vld [vmem:[#allocation13 + $0x78] sm:$0xff]
    %v620 = vld [vmem:[%s12] sm:$0x1]
    %v622 = vlaneseq
    %v623 = vshrl.u32 %v622, 7
    %v624 = vsub.s32 0, %v623
    %v625 = vrot.slane %v620, %v624
    %627 = vmatprep.subr.mxu0 0.0
    %628 = vmatpush1.msra.mxu0 %v604
    %629 = vmatprep.subr.mxu0 0.0
    %630 = vmatpush1.msra.mxu0 %v605
    %631 = vmatprep.subr.mxu0 0.0
    %632 = vmatpush1.msra.mxu0 %v606
    %633 = vmatprep.subr.mxu0 0.0
    %634 = vmatpush1.msra.mxu0 %v607
    %635 = vmatprep.subr.mxu0 0.0
    %636 = vmatpush1.msra.mxu0 %v608
    %637 = vmatprep.subr.mxu0 0.0
    %638 = vmatpush1.msra.mxu0 %v609
    %639 = vmatprep.subr.mxu0 0.0
    %640 = vmatpush1.msra.mxu0 %v610
    %641 = vmatprep.subr.mxu0 0.0
    %642 = vmatpush1.msra.mxu0 %v611
    %643 = vmatprep.subr.mxu0 0.0
    %644 = vmatpush1.msra.mxu0 %v612
    %645 = vmatprep.subr.mxu0 0.0
    %646 = vmatpush1.msra.mxu0 %v613
    %647 = vmatprep.subr.mxu0 0.0
    %648 = vmatpush1.msra.mxu0 %v614
    %649 = vmatprep.subr.mxu0 0.0
    %650 = vmatpush1.msra.mxu0 %v615
    %651 = vmatprep.subr.mxu0 0.0
    %652 = vmatpush1.msra.mxu0 %v616
    %653 = vmatprep.subr.mxu0 0.0
    %654 = vmatpush1.msra.mxu0 %v617
    %655 = vmatprep.subr.mxu0 0.0
    %656 = vmatpush1.msra.mxu0 %v618
    %657 = vmatprep.subr.mxu0 0.0
    %658 = vmatpush1.msra.mxu0 %v619
    %659 = vmatprep.subr.mxu0 0.0
    %660 = vmatpush1.msra.mxu0 0.0
    %661 = vmatprep.subr.mxu0 0.0
    %662 = vmatpush1.msra.mxu0 0.0
    %663 = vmatprep.subr.mxu0 0.0
    %664 = vmatpush1.msra.mxu0 0.0
    %665 = vmatprep.subr.mxu0 0.0
    %666 = vmatpush1.msra.mxu0 0.0
    %667 = vmatprep.subr.mxu0 0.0
    %668 = vmatpush1.msra.mxu0 0.0
    %669 = vmatprep.subr.mxu0 0.0
    %670 = vmatpush1.msra.mxu0 0.0
    %671 = vmatprep.subr.mxu0 0.0
    %672 = vmatpush1.msra.mxu0 0.0
    %673 = vmatprep.subr.mxu0 0.0
    %674 = vmatpush1.msra.mxu0 0.0
    %675 = vmatprep.subr.mxu0 0.0
    %676 = vmatpush1.msra.mxu0 0.0
    %677 = vmatprep.subr.mxu0 0.0
    %678 = vmatpush1.msra.mxu0 0.0
    %679 = vmatprep.subr.mxu0 0.0
    %680 = vmatpush1.msra.mxu0 0.0
    %681 = vmatprep.subr.mxu0 0.0
    %682 = vmatpush1.msra.mxu0 0.0
    %683 = vmatprep.subr.mxu0 0.0
    %684 = vmatpush1.msra.mxu0 0.0
    %685 = vmatprep.subr.mxu0 0.0
    %686 = vmatpush1.msra.mxu0 0.0
    %687 = vmatprep.subr.mxu0 0.0
    %688 = vmatpush1.msra.mxu0 0.0
    %689 = vmatprep.subr.mxu0 0.0
    %690 = vmatpush1.msra.mxu0 0.0
    %691 = vmatprep.mubr.f32.mxu0 0.0
    %692 = vmatmul.mubr.f32.gmra.mrb[0].mxu0 %v603
    %v693 = vpop.f32.mrb[0].mxu0
    %v694 = vadd.f32 %v625, %v693
    %v695 = vpop.f32.mrb[0].mxu0
    %696 = vdwg.mxu0
    %697 = vst.msk [vmem:[#allocation14] sm:$0xff] %vm154, %v694
    // Predicated region
    $region82: #{tpu_custom_call.1} parent=1 // pred_check
      _
    $region83: #{tpu_custom_call.1} parent=1 // pred_check_branch
      %699 = sbr.rel (0) target = $region85
    $region84: #{tpu_custom_call.1} parent=1 // pred_region
      %s701 = ssub.s32 128, 128
      %702 = vsyncadd [#allocation4], %s701
      %s704 = sshll.u32 [#allocation14], 4
      %s705 = int_to_ptr.vmem [resolvable:$true] %s704
      %707 = dma.vmem_to_hbm [thread:$0]  %s705, 128, %s13, [#allocation4]
    $region85: #{tpu_custom_call.1} parent=1 // pred_fallthru
      _
    // Predicated region
    $region86: #{tpu_custom_call.1} parent=1 // pred_check
      _
    $region87: #{tpu_custom_call.1} parent=1 // pred_check_branch
      %709 = sbr.rel (0) target = $region89
    $region88: #{tpu_custom_call.1} parent=1 // pred_region
      %710 = dma.done [#allocation4], 128
    $region89: #{tpu_custom_call.1} parent=1 // pred_fallthru
      _
    %711 = vsyncpa [#allocation3], 1
    %712 = vsyncpa [#allocation6], 1
    %713 = vsyncpa [#allocation9], 1
    %714 = vsyncpa [#allocation12], 1
    %715 = vsyncpa [#allocation4], 1

</llo_original>
